<compile_context>
chip_gen: v7x
topology: tpu7x:2x2x1
jax: 0.10.0
libtpu: 0.0.40
codegen_flags: <defaults>
</compile_context>

<pallas_src>
import functools

import jax
import jax.numpy as jnp
from jax.experimental import pallas as pl
from jax.experimental.pallas import tpu as pltpu


def _se_kernel(x_ref, wd_ref, bd_ref, wut_ref, bu_ref, o_ref):
    # x_ref  : (B_TILE, C, H*W)  input tile (caller dtype: f32 or bf16)
    # wd_ref : (Cint, C)         down-projection weight (Conv2d(C, Cint, 1).weight)
    # bd_ref : (1, Cint)         down-projection bias
    # wut_ref: (Cint, C)         up-projection weight, stored transposed
    # bu_ref : (1, C)            up-projection bias

    # ---- squeeze: adaptive_avg_pool2d(., (1,1)) == mean over spatial lanes (f32 accum)
    pooled = jnp.mean(x_ref[...], axis=-1, dtype=jnp.float32)             # (B, C)

    # ---- down 1x1 conv + ReLU: VPU broadcast-mul + lane reduce (XLU), MXU skipped
    d = jnp.sum(pooled[:, None, :] * wd_ref[...][None, :, :], axis=-1) + bd_ref[...]
    d = jnp.maximum(d, 0.0)                                               # (B, Cint)

    # ---- up 1x1 conv + sigmoid (EUP)
    u = jnp.sum(d[:, :, None] * wut_ref[...][None, :, :], axis=1) + bu_ref[...]
    gate = jax.nn.sigmoid(u)                                              # (B, C) f32

    # ---- excite: re-read the tile from VMEM at the store so it is not kept live
    #      in vregs across the long pooled->gate dependency chain (no spills at
    #      large b_tile).  Gate mul runs in the I/O dtype (f32 here; bf16 ok on
    #      v6e/v7x).  TODO(synk): force f32 gate multiply on v5e if bf16 I/O is used.
    o_ref[...] = x_ref[...] * gate.astype(o_ref.dtype)[:, :, None]


def _choose_b_tile(n, c, hw, itemsize, *, max_tile_bytes=8 << 20):
    """Largest divisor of n whose tile fits max_tile_bytes, preferring grid >= 2."""
    per_sample = max(1, c * hw * itemsize)
    cap = max(1, max_tile_bytes // per_sample)
    divisors = [d for d in range(1, n + 1) if n % d == 0 and d <= cap] or [1]
    # Keep >= 2 grid steps when possible so the "parallel" batch axis can shard
    # across v7x's two TensorCores; otherwise just take the largest tile.
    preferred = [d for d in divisors if n // d >= 2]
    return max(preferred) if preferred else max(divisors)


def make_params(key, input_channels, internal_neurons):
    """Deterministic synthetic parameters matching the module's shapes."""
    kd, kbd, ku, kbu = jax.random.split(key, 4)
    # Conv2d(C, Cint, 1): weight (Cint, C, 1, 1) -> (Cint, C), bias (Cint,)
    w_down = 0.3 * jax.random.normal(kd, (internal_neurons, input_channels), jnp.float32)
    b_down = 0.1 * jax.random.normal(kbd, (1, internal_neurons), jnp.float32)
    # Conv2d(Cint, C, 1): weight (C, Cint, 1, 1) -> stored transposed (Cint, C)
    w_up_t = 0.3 * jax.random.normal(ku, (internal_neurons, input_channels), jnp.float32)
    b_up = 0.1 * jax.random.normal(kbu, (1, input_channels), jnp.float32)
    return dict(w_down=w_down, b_down=b_down, w_up_t=w_up_t, b_up=b_up)


@functools.partial(jax.jit, static_argnames=("b_tile", "donate_x"))
def se_block(x_nchw, params, b_tile=None, donate_x=False):
    N, C, H, W = x_nchw.shape
    HW = H * W
    itemsize = jnp.dtype(x_nchw.dtype).itemsize
    if b_tile is None:
        b_tile = _choose_b_tile(N, C, HW, itemsize)
    assert N % b_tile == 0, "batch must be divisible by b_tile (auto-chooser always is)"

    # Free reshape of contiguous NCHW memory (no transpose, no dtype cast/copy).
    x = x_nchw.reshape(N, C, HW)

    wd, bd = params["w_down"], params["b_down"]
    wut, bu = params["w_up_t"], params["b_up"]

    def _full(a):
        z = (0,) * a.ndim
        return pl.BlockSpec(a.shape, lambda n, z=z: z)

    # VMEM budget: 2 input + 2 output pipelined tile buffers + resident weights,
    # with slack; capped at 64 MiB so v7x (64 MiB physical per TC) never OOMs.
    tile_bytes = b_tile * C * HW * itemsize
    param_bytes = sum(int(p.size) * jnp.dtype(p.dtype).itemsize for p in (wd, bd, wut, bu))
    vmem_limit = int(min(64 << 20, max(16 << 20, 4 * tile_bytes + 4 * param_bytes + (2 << 20))))

    cost = pl.CostEstimate(
        flops=int(2 * N * C * HW + 4 * N * C * wd.shape[0]),
        transcendentals=int(N * C),
        bytes_accessed=int(2 * N * C * HW * itemsize + param_bytes),
    )

    out = pl.pallas_call(
        _se_kernel,
        out_shape=jax.ShapeDtypeStruct((N, C, HW), x.dtype),
        grid=(N // b_tile,),
        in_specs=[
            pl.BlockSpec((b_tile, C, HW), lambda n: (n, 0, 0)),
            _full(wd), _full(bd), _full(wut), _full(bu),
        ],
        out_specs=pl.BlockSpec((b_tile, C, HW), lambda n: (n, 0, 0)),
        compiler_params=pltpu.CompilerParams(
            dimension_semantics=("parallel",),
            vmem_limit_bytes=vmem_limit,
        ),
        cost_estimate=cost,
        # Donate x when the caller also donates it at the jit boundary; out has
        # identical shape/dtype and every input block is consumed before its
        # output block is written back.
        input_output_aliases=({0: 0} if donate_x else {}),
    )(x, wd, bd, wut, bu)
    return out.reshape(N, C, H, W)


def _reference(x, params):
    """Pure-JAX reference of the PyTorch SEBlock.forward (eval mode)."""
    pooled = jnp.mean(x, axis=(2, 3))                                   # (N, C)
    d = jnp.maximum(pooled @ params["w_down"].T + params["b_down"], 0.0)
    g = jax.nn.sigmoid(d @ params["w_up_t"] + params["b_up"])           # (N, C)
    return x * g[:, :, None, None]


if __name__ == "__main__":
    key = jax.random.PRNGKey(0)
    kx, kp = jax.random.split(key)

    # SEBlock(input_channels=32, internal_neurons=8) on a (2, 32, 16, 16) input.
    N, C, H, W = 2, 32, 16, 16
    Cint = C // 4
    x = jax.random.normal(kx, (N, C, H, W), jnp.float32)
    params = make_params(kp, C, Cint)

    # Auto b_tile -> 1 here (keeps grid=(2,) for v7x's two TensorCores); on real
    # batch sizes the chooser picks ~2-8 MiB tiles to amortize per-step overhead.
    out = se_block(x, params)
    jax.block_until_ready(out)
    assert out.shape == (N, C, H, W)
    assert out.dtype == x.dtype

    ref = _reference(x, params)
    assert jnp.allclose(out, ref, rtol=1e-5, atol=1e-5)
    print("KERNEL_OK")
</pallas_src>

<mosaic_0001>
module attributes {stable_mosaic.version = 11 : i64} {
  func.func @_se_kernel(%arg0: i32, %arg1: memref<1x32x256xf32, #tpu.memory_space<vmem>>, %arg2: memref<8x32xf32, #tpu.memory_space<vmem>>, %arg3: memref<1x8xf32, #tpu.memory_space<vmem>>, %arg4: memref<8x32xf32, #tpu.memory_space<vmem>>, %arg5: memref<1x32xf32, #tpu.memory_space<vmem>>, %arg6: memref<1x32x256xf32, #tpu.memory_space<vmem>>) attributes {dimension_semantics = [#tpu.dimension_semantics<parallel>], iteration_bounds = array<i64: 2>, scalar_prefetch = 0 : i64, scratch_operands = 0 : i64, tpu.core_type = #tpu.core_type<tc>, window_params = [{transform_indices = @transform_0, window_bounds = array<i64: 1, 32, 256>}, {pipeline_mode = #tpu.pipeline_mode<synchronous>, transform_indices = @transform_1, window_bounds = array<i64: 8, 32>}, {pipeline_mode = #tpu.pipeline_mode<synchronous>, transform_indices = @transform_2, window_bounds = array<i64: 1, 8>}, {pipeline_mode = #tpu.pipeline_mode<synchronous>, transform_indices = @transform_3, window_bounds = array<i64: 8, 32>}, {pipeline_mode = #tpu.pipeline_mode<synchronous>, transform_indices = @transform_4, window_bounds = array<i64: 1, 32>}, {transform_indices = @transform_5, window_bounds = array<i64: 1, 32, 256>}]} {
    %c0 = arith.constant 0 : index
    %c0_0 = arith.constant 0 : index
    %c0_1 = arith.constant 0 : index
    %0 = vector.load %arg1[%c0, %c0_0, %c0_1] : memref<1x32x256xf32, #tpu.memory_space<vmem>>, vector<1x32x256xf32>
    %cst = arith.constant dense<0.000000e+00> : vector<1x32xf32>
    %1 = vector.multi_reduction <add>, %0, %cst [2] : vector<1x32x256xf32> to vector<1x32xf32>
    %cst_2 = arith.constant 2.560000e+02 : f32
    %2 = vector.broadcast %cst_2 : f32 to vector<1x32xf32>
    %3 = arith.divf %1, %2 : vector<1x32xf32>
    %4 = vector.shape_cast %3 : vector<1x32xf32> to vector<1x1x32xf32>
    %c0_3 = arith.constant 0 : index
    %c0_4 = arith.constant 0 : index
    %5 = vector.load %arg2[%c0_3, %c0_4] : memref<8x32xf32, #tpu.memory_space<vmem>>, vector<8x32xf32>
    %6 = vector.shape_cast %5 : vector<8x32xf32> to vector<1x8x32xf32>
    %7 = vector.broadcast %4 : vector<1x1x32xf32> to vector<1x8x32xf32>
    %8 = arith.mulf %7, %6 : vector<1x8x32xf32>
    %cst_5 = arith.constant dense<0.000000e+00> : vector<1x8xf32>
    %9 = vector.multi_reduction <add>, %8, %cst_5 [2] : vector<1x8x32xf32> to vector<1x8xf32>
    %c0_6 = arith.constant 0 : index
    %c0_7 = arith.constant 0 : index
    %10 = vector.load %arg3[%c0_6, %c0_7] : memref<1x8xf32, #tpu.memory_space<vmem>>, vector<1x8xf32>
    %11 = arith.addf %9, %10 : vector<1x8xf32>
    %cst_8 = arith.constant 0.000000e+00 : f32
    %12 = vector.broadcast %cst_8 : f32 to vector<1x8xf32>
    %13 = arith.maximumf %11, %12 : vector<1x8xf32>
    %14 = vector.shape_cast %13 : vector<1x8xf32> to vector<1x8x1xf32>
    %c0_9 = arith.constant 0 : index
    %c0_10 = arith.constant 0 : index
    %15 = vector.load %arg4[%c0_9, %c0_10] : memref<8x32xf32, #tpu.memory_space<vmem>>, vector<8x32xf32>
    %16 = vector.shape_cast %15 : vector<8x32xf32> to vector<1x8x32xf32>
    %17 = vector.broadcast %14 : vector<1x8x1xf32> to vector<1x8x32xf32>
    %18 = arith.mulf %17, %16 : vector<1x8x32xf32>
    %cst_11 = arith.constant dense<0.000000e+00> : vector<1x32xf32>
    %19 = vector.multi_reduction <add>, %18, %cst_11 [1] : vector<1x8x32xf32> to vector<1x32xf32>
    %c0_12 = arith.constant 0 : index
    %c0_13 = arith.constant 0 : index
    %20 = vector.load %arg5[%c0_12, %c0_13] : memref<1x32xf32, #tpu.memory_space<vmem>>, vector<1x32xf32>
    %21 = arith.addf %19, %20 : vector<1x32xf32>
    %22 = arith.negf %21 : vector<1x32xf32>
    %23 = math.exp %22 : vector<1x32xf32>
    %cst_14 = arith.constant 1.000000e+00 : f32
    %24 = vector.broadcast %cst_14 : f32 to vector<1x32xf32>
    %25 = arith.addf %24, %23 : vector<1x32xf32>
    %26 = arith.divf %24, %25 : vector<1x32xf32>
    %c0_15 = arith.constant 0 : index
    %c0_16 = arith.constant 0 : index
    %c0_17 = arith.constant 0 : index
    %27 = vector.load %arg1[%c0_15, %c0_16, %c0_17] : memref<1x32x256xf32, #tpu.memory_space<vmem>>, vector<1x32x256xf32>
    %28 = vector.shape_cast %26 : vector<1x32xf32> to vector<1x32x1xf32>
    %29 = vector.broadcast %28 : vector<1x32x1xf32> to vector<1x32x256xf32>
    %30 = arith.mulf %27, %29 : vector<1x32x256xf32>
    %c0_18 = arith.constant 0 : index
    %c0_19 = arith.constant 0 : index
    %c0_20 = arith.constant 0 : index
    %31 = vector.load %arg6[%c0_18, %c0_19, %c0_20] : memref<1x32x256xf32, #tpu.memory_space<vmem>>, vector<1x32x256xf32>
    tpu.vector_store %arg6[%c0_18, %c0_19, %c0_20], %30 {strides = array<i32>} : memref<1x32x256xf32, #tpu.memory_space<vmem>>, vector<1x32x256xf32>,
    return
  }
  func.func @transform_0(%arg0: i32) -> (i32, i32, i32) {
    %c0_i32 = arith.constant 0 : i32
    %c0_i32_0 = arith.constant 0 : i32
    %c0_i32_1 = arith.constant 0 : i32
    return %arg0, %c0_i32, %c0_i32_0 : i32, i32, i32
  }
  func.func @transform_1(%arg0: i32) -> (i32, i32) {
    %c0_i32 = arith.constant 0 : i32
    %c0_i32_0 = arith.constant 0 : i32
    %c0_i32_1 = arith.constant 0 : i32
    return %c0_i32, %c0_i32_0 : i32, i32
  }
  func.func @transform_2(%arg0: i32) -> (i32, i32) {
    %c0_i32 = arith.constant 0 : i32
    %c0_i32_0 = arith.constant 0 : i32
    %c0_i32_1 = arith.constant 0 : i32
    return %c0_i32, %c0_i32_0 : i32, i32
  }
  func.func @transform_3(%arg0: i32) -> (i32, i32) {
    %c0_i32 = arith.constant 0 : i32
    %c0_i32_0 = arith.constant 0 : i32
    %c0_i32_1 = arith.constant 0 : i32
    return %c0_i32, %c0_i32_0 : i32, i32
  }
  func.func @transform_4(%arg0: i32) -> (i32, i32) {
    %c0_i32 = arith.constant 0 : i32
    %c0_i32_0 = arith.constant 0 : i32
    %c0_i32_1 = arith.constant 0 : i32
    return %c0_i32, %c0_i32_0 : i32, i32
  }
  func.func @transform_5(%arg0: i32) -> (i32, i32, i32) {
    %c0_i32 = arith.constant 0 : i32
    %c0_i32_0 = arith.constant 0 : i32
    %c0_i32_1 = arith.constant 0 : i32
    return %arg0, %c0_i32, %c0_i32_0 : i32, i32, i32
  }
}

</mosaic_0001>

<llo_original>
// kernel: se_block.1
$region0: #{se_block.1}
  #allocation0 [shape = 'u32[]', space=smem, size = 0x4, offset = 0x4, fixed_abs, tag = 'smem constant byte address 0x4 - core index']
  #allocation1 [shape = 'u32[144,128]{1,0:T(1,128)}', space=vmem, size = 0x12000, scoped, tag = 'internal scratch']
  %s0 = inlined_call_operand.vmem [shape: f32[2,32,256], index: 0, kind: input, shape index: {}]
  %s1 = inlined_call_operand.vmem [shape: f32[8,32], index: 1, kind: input, shape index: {}]
  %s2 = inlined_call_operand.vmem [shape: f32[1,8], index: 2, kind: input, shape index: {}]
  %s3 = inlined_call_operand.vmem [shape: f32[8,32], index: 3, kind: input, shape index: {}]
  %s4 = inlined_call_operand.vmem [shape: f32[1,32], index: 4, kind: input, shape index: {}]
  %s5 = inlined_call_operand.vmem [shape: f32[2,32,256], index: 5, kind: output, shape index: {}]
  %s6 = sld [smem:[#allocation0]]
  $region53: #{se_block.1} parent=0
    _
  %s8 = ssub.s32 1, %s6
  %s9 = scalar_select 0, %s8, %s6
  loop: start=0, step=1, limit=4
  $region2: #{se_block.1} parent=0 // loop_pre_header
    _
  $region3: #{se_block.1} parent=0 // loop_header
    %s11 = sphi 0, %s15
    %p12 = scmp.ge.s32.totalorder %s11, 4
    %s21 = sphi 0, %s23
    %s24 = sphi 0, %s21
    %s25 = sphi 0, %s24
    %s41 = sphi 0, %s25
    %s45 = sphi 0, %s45
    %s47 = sphi 0, %s45
    %s48 = sphi 0, %s47
    %s62 = sphi 0, %s48
    %s66 = sphi 0, %s66
    %s68 = sphi 0, %s66
    %s69 = sphi 0, %s68
    %s83 = sphi 0, %s69
    %s87 = sphi 0, %s87
    %s89 = sphi 0, %s87
    %s90 = sphi 0, %s89
    %s104 = sphi 0, %s90
    %s108 = sphi 0, %s108
    %s110 = sphi 0, %s108
    %s111 = sphi 0, %s110
    %s125 = sphi 0, %s111
    %s131 = sphi 0, %s133
    %s134 = sphi 0, %s131
    %s135 = sphi 0, %s134
    %s151 = sphi 0, %s135
  $region4: #{se_block.1} parent=0 // loop_header_branch
    %14 = sbr.rel (%p12) target = $region8
  $region5: #{se_block.1} parent=0 // loop_body
    %s16 = ssub.s32 %s11, 1
    %s17 = ssub.s32 %s11, 2
    %s18 = sadd.s32 %s11, 1
    %s19 = ssub.s32 %s11, %s18
    %p20 = scmp.eq.s32.totalorder %s19, 0
    %s22 = sadd.s32 %s21, 1
    %s23 = scalar_select %p20, %s21, %s22
    %p26 = pneg %p20
    %p27 = scmp.eq.s32.totalorder %s11, 1
    %p28 = por %p26, %p27
    %p29 = scmp.ne.s32.totalorder %s21, %s24
    %p30 = scmp.eq.s32.totalorder %s11, 0
    %p31 = por %p29, %p30
    %p32 = scmp.ne.s32.totalorder %s21, %s24
    %p33 = scmp.eq.s32.totalorder %s16, 1
    %p34 = por %p32, %p33
    %p35 = scmp.ne.s32.totalorder %s24, %s25
    %p36 = scmp.eq.s32.totalorder %s16, 0
    %p37 = por %p35, %p36
    %p38 = scmp.ne.s32.totalorder %s24, %s25
    %p39 = scmp.eq.s32.totalorder %s17, 1
    %p40 = por %p38, %p39
    %p42 = scmp.ne.s32.totalorder %s25, %s41
    %p43 = scmp.eq.s32.totalorder %s17, 0
    %p44 = por %p42, %p43
    %s46 = sadd.s32 %s45, 1
    %p49 = scmp.eq.s32.totalorder %s11, 1
    %p50 = scmp.ne.s32.totalorder %s45, %s47
    %p51 = scmp.eq.s32.totalorder %s11, 0
    %p52 = por %p50, %p51
    %p53 = scmp.ne.s32.totalorder %s45, %s47
    %p54 = scmp.eq.s32.totalorder %s16, 1
    %p55 = por %p53, %p54
    %p56 = scmp.ne.s32.totalorder %s47, %s48
    %p57 = scmp.eq.s32.totalorder %s16, 0
    %p58 = por %p56, %p57
    %p59 = scmp.ne.s32.totalorder %s47, %s48
    %p60 = scmp.eq.s32.totalorder %s17, 1
    %p61 = por %p59, %p60
    %p63 = scmp.ne.s32.totalorder %s48, %s62
    %p64 = scmp.eq.s32.totalorder %s17, 0
    %p65 = por %p63, %p64
    %s67 = sadd.s32 %s66, 1
    %p70 = scmp.eq.s32.totalorder %s11, 1
    %p71 = scmp.ne.s32.totalorder %s66, %s68
    %p72 = scmp.eq.s32.totalorder %s11, 0
    %p73 = por %p71, %p72
    %p74 = scmp.ne.s32.totalorder %s66, %s68
    %p75 = scmp.eq.s32.totalorder %s16, 1
    %p76 = por %p74, %p75
    %p77 = scmp.ne.s32.totalorder %s68, %s69
    %p78 = scmp.eq.s32.totalorder %s16, 0
    %p79 = por %p77, %p78
    %p80 = scmp.ne.s32.totalorder %s68, %s69
    %p81 = scmp.eq.s32.totalorder %s17, 1
    %p82 = por %p80, %p81
    %p84 = scmp.ne.s32.totalorder %s69, %s83
    %p85 = scmp.eq.s32.totalorder %s17, 0
    %p86 = por %p84, %p85
    %s88 = sadd.s32 %s87, 1
    %p91 = scmp.eq.s32.totalorder %s11, 1
    %p92 = scmp.ne.s32.totalorder %s87, %s89
    %p93 = scmp.eq.s32.totalorder %s11, 0
    %p94 = por %p92, %p93
    %p95 = scmp.ne.s32.totalorder %s87, %s89
    %p96 = scmp.eq.s32.totalorder %s16, 1
    %p97 = por %p95, %p96
    %p98 = scmp.ne.s32.totalorder %s89, %s90
    %p99 = scmp.eq.s32.totalorder %s16, 0
    %p100 = por %p98, %p99
    %p101 = scmp.ne.s32.totalorder %s89, %s90
    %p102 = scmp.eq.s32.totalorder %s17, 1
    %p103 = por %p101, %p102
    %p105 = scmp.ne.s32.totalorder %s90, %s104
    %p106 = scmp.eq.s32.totalorder %s17, 0
    %p107 = por %p105, %p106
    %s109 = sadd.s32 %s108, 1
    %p112 = scmp.eq.s32.totalorder %s11, 1
    %p113 = scmp.ne.s32.totalorder %s108, %s110
    %p114 = scmp.eq.s32.totalorder %s11, 0
    %p115 = por %p113, %p114
    %p116 = scmp.ne.s32.totalorder %s108, %s110
    %p117 = scmp.eq.s32.totalorder %s16, 1
    %p118 = por %p116, %p117
    %p119 = scmp.ne.s32.totalorder %s110, %s111
    %p120 = scmp.eq.s32.totalorder %s16, 0
    %p121 = por %p119, %p120
    %p122 = scmp.ne.s32.totalorder %s110, %s111
    %p123 = scmp.eq.s32.totalorder %s17, 1
    %p124 = por %p122, %p123
    %p126 = scmp.ne.s32.totalorder %s111, %s125
    %p127 = scmp.eq.s32.totalorder %s17, 0
    %p128 = por %p126, %p127
    %s129 = ssub.s32 %s11, %s18
    %p130 = scmp.eq.s32.totalorder %s129, 0
    %s132 = sadd.s32 %s131, 1
    %s133 = scalar_select %p130, %s131, %s132
    %p136 = pneg %p130
    %p137 = scmp.eq.s32.totalorder %s11, 1
    %p138 = por %p136, %p137
    %p139 = scmp.ne.s32.totalorder %s131, %s134
    %p140 = scmp.eq.s32.totalorder %s11, 0
    %p141 = por %p139, %p140
    %p142 = scmp.ne.s32.totalorder %s131, %s134
    %p143 = scmp.eq.s32.totalorder %s16, 1
    %p144 = por %p142, %p143
    %p145 = scmp.ne.s32.totalorder %s134, %s135
    %p146 = scmp.eq.s32.totalorder %s16, 0
    %p147 = por %p145, %p146
    %p148 = scmp.ne.s32.totalorder %s134, %s135
    %p149 = scmp.eq.s32.totalorder %s17, 1
    %p150 = por %p148, %p149
    %p152 = scmp.ne.s32.totalorder %s135, %s151
    %p153 = scmp.eq.s32.totalorder %s17, 0
    %p154 = por %p152, %p153
    %p155 = scmp.le.s32.totalorder 1, %s11
    %p156 = scmp.lt.s32.totalorder %s11, 3
    %p157 = pnand %p155, %p156
    %p158 = pneg %p157
    // Predicated region
    $region9: #{se_block.1} parent=5 // pred_check
      _
    $region10: #{se_block.1} parent=5 // pred_check_branch
      %160 = sbr.rel (%p157) target = $region12
    $region11: #{se_block.1} parent=5 // pred_region
      %s161 = ssub.s32 %s11, 1
      // Predicated region
      $region13: #{se_block.1} parent=11 // pred_check
        %p162 = pneg %p58
      $region14: #{se_block.1} parent=11 // pred_check_branch
        %164 = sbr.rel (%p162) target = $region16
      $region15: #{se_block.1} parent=11 // pred_region
        _
      $region16: #{se_block.1} parent=11 // pred_fallthru
        _
      // Predicated region
      $region17: #{se_block.1} parent=11 // pred_check
        %p165 = pneg %p79
      $region18: #{se_block.1} parent=11 // pred_check_branch
        %167 = sbr.rel (%p165) target = $region20
      $region19: #{se_block.1} parent=11 // pred_region
        _
      $region20: #{se_block.1} parent=11 // pred_fallthru
        _
      // Predicated region
      $region21: #{se_block.1} parent=11 // pred_check
        %p168 = pneg %p100
      $region22: #{se_block.1} parent=11 // pred_check_branch
        %170 = sbr.rel (%p168) target = $region24
      $region23: #{se_block.1} parent=11 // pred_region
        _
      $region24: #{se_block.1} parent=11 // pred_fallthru
        _
      // Predicated region
      $region25: #{se_block.1} parent=11 // pred_check
        %p171 = pneg %p121
      $region26: #{se_block.1} parent=11 // pred_check_branch
        %173 = sbr.rel (%p171) target = $region28
      $region27: #{se_block.1} parent=11 // pred_region
        _
      $region28: #{se_block.1} parent=11 // pred_fallthru
        _
    $region12: #{se_block.1} parent=5 // pred_fallthru
      _
    %p174 = scmp.lt.s32.totalorder %s11, 2
    // Predicated region
    $region29: #{se_block.1} parent=5 // pred_check
      %p175 = pneg %p174
    $region30: #{se_block.1} parent=5 // pred_check_branch
      %177 = sbr.rel (%p175) target = $region32
    $region31: #{se_block.1} parent=5 // pred_region
      // Predicated region
      $region33: #{se_block.1} parent=31 // pred_check
        %p178 = pneg %p31
      $region34: #{se_block.1} parent=31 // pred_check_branch
        %180 = sbr.rel (%p178) target = $region36
      $region35: #{se_block.1} parent=31 // pred_region
        %p181 = scmp.lt.s32.totalorder %s11, 1
        %s182 = scalar_select %p181, %s11, 1
        %s183 = smul.addr %s182, 8
        %s184 = smul.addr %s183, 8
        %s185 = scalar_lea.vmem %s0, %s184
      $region36: #{se_block.1} parent=31 // pred_fallthru
        _
    $region32: #{se_block.1} parent=5 // pred_fallthru
      _
    %p186 = scmp.le.s32.totalorder 1, %s11
    %p187 = scmp.lt.s32.totalorder %s11, 3
    %p188 = pnand %p186, %p187
    %p189 = pneg %p188
    // Predicated region
    $region37: #{se_block.1} parent=5 // pred_check
      _
    $region38: #{se_block.1} parent=5 // pred_check_branch
      %191 = sbr.rel (%p188) target = $region40
    $region39: #{se_block.1} parent=5 // pred_region
      %s192 = ssub.s32 %s11, 1
      %p193 = scmp.lt.s32.totalorder %s16, 1
      %s194 = scalar_select %p193, %s16, 1
      %s195 = smul.addr %s194, 8
      %s196 = smul.addr %s195, 8
      %s197 = scalar_lea.vmem %s0, %s196
      %p198 = pneg %p37
      %p199 = pneg %p34
      %p200 = pneg %p58
      %p201 = pneg %p55
      %p202 = pneg %p79
      %p203 = pneg %p76
      %p204 = pneg %p100
      %p205 = pneg %p97
      %p206 = pneg %p121
      %p207 = pneg %p118
      %p208 = pneg %p147
      %p209 = pneg %p144
      %p210 = scmp.lt.s32.totalorder %s16, 1
      %s211 = scalar_select %p210, %s16, 1
      %s212 = smul.addr %s211, 8
      %s213 = smul.addr %s212, 8
      %s214 = scalar_lea.vmem %s5, %s213
      %p215 = scmp.lt.s32.totalorder %s16, 1
      %s216 = scalar_select %p215, %s16, 1
      %s217 = smul.addr %s216, 8
      %s218 = smul.addr %s217, 8
      %s219 = scalar_lea.vmem %s0, %s218
      %p220 = scmp.lt.s32.totalorder %s16, 1
      %s221 = scalar_select %p220, %s16, 1
      %s222 = smul.addr %s221, 8
      %s223 = smul.addr %s222, 8
      %s224 = scalar_lea.vmem %s5, %s223
      %v225 = vld [vmem:[%s219] sm:$0xff]
      %v226 = vld [vmem:[%s219 + $0x8] sm:$0xff]
      %v227 = vld [vmem:[%s219 + $0x10] sm:$0xff]
      %v228 = vld [vmem:[%s219 + $0x18] sm:$0xff]
      %v229 = vld [vmem:[%s219 + $0x20] sm:$0xff]
      %v230 = vld [vmem:[%s219 + $0x28] sm:$0xff]
      %v231 = vld [vmem:[%s219 + $0x30] sm:$0xff]
      %v232 = vld [vmem:[%s219 + $0x38] sm:$0xff]
      %v233 = vadd.f32 %v225, %v226
      %234 = vadd.xlane.f32.xlu0 %v233
      %v235 = vpop.xlane.xlu0 %234
      %v236 = vadd.f32 %v227, %v228
      %237 = vadd.xlane.f32.xlu0 %v236
      %v238 = vpop.xlane.xlu0 %237
      %v239 = vadd.f32 %v229, %v230
      %240 = vadd.xlane.f32.xlu0 %v239
      %v241 = vpop.xlane.xlu0 %240
      %v242 = vadd.f32 %v231, %v232
      %243 = vadd.xlane.f32.xlu0 %v242
      %v244 = vpop.xlane.xlu0 %243
      %v245 = vrcp.pop 256.0
      %v246 = vmul.f32 %v235, %v245
      %v247 = vmul.f32 %v238, %v245
      %v248 = vmul.f32 %v241, %v245
      %v249 = vmul.f32 %v244, %v245
      %v250 = vld [vmem:[%s1] sm:$0xff]
      %v252 = vlaneseq
      %v253 = vshrl.u32 %v252, 7
      %v254 = vsub.s32 0, %v253
      %v255 = vrot.slane %v250, %v254
      %257 = vbcast.lane.b32.xlu0 %v255, 256
      %v258 = vpop.permute.xlu0 %257
      %s260 = sor.u32 256, 8
      %261 = vbcast.lane.b32.xlu0 %v255, %s260
      %v262 = vpop.permute.xlu0 %261
      %s264 = sor.u32 256, 16
      %265 = vbcast.lane.b32.xlu0 %v255, %s264
      %v266 = vpop.permute.xlu0 %265
      %s268 = sor.u32 256, 24
      %269 = vbcast.lane.b32.xlu0 %v255, %s268
      %v270 = vpop.permute.xlu0 %269
      %v271 = vlaneseq
      %v272 = vshrl.u32 %v271, 7
      %v273 = vsub.s32 1, %v272
      %v274 = vrot.slane %v250, %v273
      %276 = vbcast.lane.b32.xlu0 %v274, 256
      %v277 = vpop.permute.xlu0 %276
      %s279 = sor.u32 256, 8
      %280 = vbcast.lane.b32.xlu0 %v274, %s279
      %v281 = vpop.permute.xlu0 %280
      %s283 = sor.u32 256, 16
      %284 = vbcast.lane.b32.xlu0 %v274, %s283
      %v285 = vpop.permute.xlu0 %284
      %s287 = sor.u32 256, 24
      %288 = vbcast.lane.b32.xlu0 %v274, %s287
      %v289 = vpop.permute.xlu0 %288
      %v290 = vlaneseq
      %v291 = vshrl.u32 %v290, 7
      %v292 = vsub.s32 2, %v291
      %v293 = vrot.slane %v250, %v292
      %295 = vbcast.lane.b32.xlu0 %v293, 256
      %v296 = vpop.permute.xlu0 %295
      %s298 = sor.u32 256, 8
      %299 = vbcast.lane.b32.xlu0 %v293, %s298
      %v300 = vpop.permute.xlu0 %299
      %s302 = sor.u32 256, 16
      %303 = vbcast.lane.b32.xlu0 %v293, %s302
      %v304 = vpop.permute.xlu0 %303
      %s306 = sor.u32 256, 24
      %307 = vbcast.lane.b32.xlu0 %v293, %s306
      %v308 = vpop.permute.xlu0 %307
      %v309 = vlaneseq
      %v310 = vshrl.u32 %v309, 7
      %v311 = vsub.s32 3, %v310
      %v312 = vrot.slane %v250, %v311
      %314 = vbcast.lane.b32.xlu0 %v312, 256
      %v315 = vpop.permute.xlu0 %314
      %s317 = sor.u32 256, 8
      %318 = vbcast.lane.b32.xlu0 %v312, %s317
      %v319 = vpop.permute.xlu0 %318
      %s321 = sor.u32 256, 16
      %322 = vbcast.lane.b32.xlu0 %v312, %s321
      %v323 = vpop.permute.xlu0 %322
      %s325 = sor.u32 256, 24
      %326 = vbcast.lane.b32.xlu0 %v312, %s325
      %v327 = vpop.permute.xlu0 %326
      %v328 = vlaneseq
      %v329 = vshrl.u32 %v328, 7
      %v330 = vsub.s32 4, %v329
      %v331 = vrot.slane %v250, %v330
      %333 = vbcast.lane.b32.xlu0 %v331, 256
      %v334 = vpop.permute.xlu0 %333
      %s336 = sor.u32 256, 8
      %337 = vbcast.lane.b32.xlu0 %v331, %s336
      %v338 = vpop.permute.xlu0 %337
      %s340 = sor.u32 256, 16
      %341 = vbcast.lane.b32.xlu0 %v331, %s340
      %v342 = vpop.permute.xlu0 %341
      %s344 = sor.u32 256, 24
      %345 = vbcast.lane.b32.xlu0 %v331, %s344
      %v346 = vpop.permute.xlu0 %345
      %v347 = vlaneseq
      %v348 = vshrl.u32 %v347, 7
      %v349 = vsub.s32 5, %v348
      %v350 = vrot.slane %v250, %v349
      %352 = vbcast.lane.b32.xlu0 %v350, 256
      %v353 = vpop.permute.xlu0 %352
      %s355 = sor.u32 256, 8
      %356 = vbcast.lane.b32.xlu0 %v350, %s355
      %v357 = vpop.permute.xlu0 %356
      %s359 = sor.u32 256, 16
      %360 = vbcast.lane.b32.xlu0 %v350, %s359
      %v361 = vpop.permute.xlu0 %360
      %s363 = sor.u32 256, 24
      %364 = vbcast.lane.b32.xlu0 %v350, %s363
      %v365 = vpop.permute.xlu0 %364
      %v366 = vlaneseq
      %v367 = vshrl.u32 %v366, 7
      %v368 = vsub.s32 6, %v367
      %v369 = vrot.slane %v250, %v368
      %371 = vbcast.lane.b32.xlu0 %v369, 256
      %v372 = vpop.permute.xlu0 %371
      %s374 = sor.u32 256, 8
      %375 = vbcast.lane.b32.xlu0 %v369, %s374
      %v376 = vpop.permute.xlu0 %375
      %s378 = sor.u32 256, 16
      %379 = vbcast.lane.b32.xlu0 %v369, %s378
      %v380 = vpop.permute.xlu0 %379
      %s382 = sor.u32 256, 24
      %383 = vbcast.lane.b32.xlu0 %v369, %s382
      %v384 = vpop.permute.xlu0 %383
      %v385 = vlaneseq
      %v386 = vshrl.u32 %v385, 7
      %v387 = vsub.s32 7, %v386
      %v388 = vrot.slane %v250, %v387
      %390 = vbcast.lane.b32.xlu0 %v388, 256
      %v391 = vpop.permute.xlu0 %390
      %s393 = sor.u32 256, 8
      %394 = vbcast.lane.b32.xlu0 %v388, %s393
      %v395 = vpop.permute.xlu0 %394
      %s397 = sor.u32 256, 16
      %398 = vbcast.lane.b32.xlu0 %v388, %s397
      %v399 = vpop.permute.xlu0 %398
      %s401 = sor.u32 256, 24
      %402 = vbcast.lane.b32.xlu0 %v388, %s401
      %v403 = vpop.permute.xlu0 %402
      %v436 = vmul.f32 %v246, %v258
      %v437 = vmul.f32 %v247, %v262
      %v438 = vmul.f32 %v248, %v266
      %v439 = vmul.f32 %v249, %v270
      %v440 = vmul.f32 %v246, %v277
      %v441 = vmul.f32 %v247, %v281
      %v442 = vmul.f32 %v248, %v285
      %v443 = vmul.f32 %v249, %v289
      %v444 = vmul.f32 %v246, %v296
      %v445 = vmul.f32 %v247, %v300
      %v446 = vmul.f32 %v248, %v304
      %v447 = vmul.f32 %v249, %v308
      %v448 = vmul.f32 %v246, %v315
      %v449 = vmul.f32 %v247, %v319
      %v450 = vmul.f32 %v248, %v323
      %v451 = vmul.f32 %v249, %v327
      %v452 = vmul.f32 %v246, %v334
      %v453 = vmul.f32 %v247, %v338
      %v454 = vmul.f32 %v248, %v342
      %v455 = vmul.f32 %v249, %v346
      %v456 = vmul.f32 %v246, %v353
      %v457 = vmul.f32 %v247, %v357
      %v458 = vmul.f32 %v248, %v361
      %v459 = vmul.f32 %v249, %v365
      %v460 = vmul.f32 %v246, %v372
      %v461 = vmul.f32 %v247, %v376
      %v462 = vmul.f32 %v248, %v380
      %v463 = vmul.f32 %v249, %v384
      %v464 = vmul.f32 %v246, %v391
      %v465 = vmul.f32 %v247, %v395
      %v466 = vmul.f32 %v248, %v399
      %v467 = vmul.f32 %v249, %v403
      %500 = vset.pattern.permute.xlu0 0
      %501 = vperm.xlu0 %500, %v436
      %v502 = vpop.permute.xlu0 %501
      %503 = vset.pattern.permute.xlu0 0
      %504 = vperm.xlu0 %503, %v437
      %v505 = vpop.permute.xlu0 %504
      %506 = vset.pattern.permute.xlu0 0
      %507 = vperm.xlu0 %506, %v438
      %v508 = vpop.permute.xlu0 %507
      %509 = vset.pattern.permute.xlu0 0
      %510 = vperm.xlu0 %509, %v439
      %v511 = vpop.permute.xlu0 %510
      %512 = vset.pattern.permute.xlu0 0
      %513 = vperm.xlu0 %512, %v440
      %v514 = vpop.permute.xlu0 %513
      %515 = vset.pattern.permute.xlu0 0
      %516 = vperm.xlu0 %515, %v441
      %v517 = vpop.permute.xlu0 %516
      %518 = vset.pattern.permute.xlu0 0
      %519 = vperm.xlu0 %518, %v442
      %v520 = vpop.permute.xlu0 %519
      %521 = vset.pattern.permute.xlu0 0
      %522 = vperm.xlu0 %521, %v443
      %v523 = vpop.permute.xlu0 %522
      %524 = vset.pattern.permute.xlu0 0
      %525 = vperm.xlu0 %524, %v444
      %v526 = vpop.permute.xlu0 %525
      %527 = vset.pattern.permute.xlu0 0
      %528 = vperm.xlu0 %527, %v445
      %v529 = vpop.permute.xlu0 %528
      %530 = vset.pattern.permute.xlu0 0
      %531 = vperm.xlu0 %530, %v446
      %v532 = vpop.permute.xlu0 %531
      %533 = vset.pattern.permute.xlu0 0
      %534 = vperm.xlu0 %533, %v447
      %v535 = vpop.permute.xlu0 %534
      %536 = vset.pattern.permute.xlu0 0
      %537 = vperm.xlu0 %536, %v448
      %v538 = vpop.permute.xlu0 %537
      %539 = vset.pattern.permute.xlu0 0
      %540 = vperm.xlu0 %539, %v449
      %v541 = vpop.permute.xlu0 %540
      %542 = vset.pattern.permute.xlu0 0
      %543 = vperm.xlu0 %542, %v450
      %v544 = vpop.permute.xlu0 %543
      %545 = vset.pattern.permute.xlu0 0
      %546 = vperm.xlu0 %545, %v451
      %v547 = vpop.permute.xlu0 %546
      %548 = vset.pattern.permute.xlu0 0
      %549 = vperm.xlu0 %548, %v452
      %v550 = vpop.permute.xlu0 %549
      %551 = vset.pattern.permute.xlu0 0
      %552 = vperm.xlu0 %551, %v453
      %v553 = vpop.permute.xlu0 %552
      %554 = vset.pattern.permute.xlu0 0
      %555 = vperm.xlu0 %554, %v454
      %v556 = vpop.permute.xlu0 %555
      %557 = vset.pattern.permute.xlu0 0
      %558 = vperm.xlu0 %557, %v455
      %v559 = vpop.permute.xlu0 %558
      %560 = vset.pattern.permute.xlu0 0
      %561 = vperm.xlu0 %560, %v456
      %v562 = vpop.permute.xlu0 %561
      %563 = vset.pattern.permute.xlu0 0
      %564 = vperm.xlu0 %563, %v457
      %v565 = vpop.permute.xlu0 %564
      %566 = vset.pattern.permute.xlu0 0
      %567 = vperm.xlu0 %566, %v458
      %v568 = vpop.permute.xlu0 %567
      %569 = vset.pattern.permute.xlu0 0
      %570 = vperm.xlu0 %569, %v459
      %v571 = vpop.permute.xlu0 %570
      %572 = vset.pattern.permute.xlu0 0
      %573 = vperm.xlu0 %572, %v460
      %v574 = vpop.permute.xlu0 %573
      %575 = vset.pattern.permute.xlu0 0
      %576 = vperm.xlu0 %575, %v461
      %v577 = vpop.permute.xlu0 %576
      %578 = vset.pattern.permute.xlu0 0
      %579 = vperm.xlu0 %578, %v462
      %v580 = vpop.permute.xlu0 %579
      %581 = vset.pattern.permute.xlu0 0
      %582 = vperm.xlu0 %581, %v463
      %v583 = vpop.permute.xlu0 %582
      %584 = vset.pattern.permute.xlu0 0
      %585 = vperm.xlu0 %584, %v464
      %v586 = vpop.permute.xlu0 %585
      %587 = vset.pattern.permute.xlu0 0
      %588 = vperm.xlu0 %587, %v465
      %v589 = vpop.permute.xlu0 %588
      %590 = vset.pattern.permute.xlu0 0
      %591 = vperm.xlu0 %590, %v466
      %v592 = vpop.permute.xlu0 %591
      %593 = vset.pattern.permute.xlu0 0
      %594 = vperm.xlu0 %593, %v467
      %v595 = vpop.permute.xlu0 %594
      %v596 = vlaneseq
      %v597 = vand.u32 %v596, 127
      %v598 = vlaneseq
      %v599 = vshrl.u32 %v598, 7
      %v600 = vsub.s32 %v597, %v599
      %v601 = vrot.slane %v502, %v600
      %v602 = vadd.s32 %v597, 4294967288
      %v603 = vlaneseq
      %v604 = vshrl.u32 %v603, 7
      %v605 = vsub.s32 %v602, %v604
      %v606 = vrot.slane %v505, %v605
      %vm607 = vcmask 130112
      %v608 = vsel %vm607, %v606, %v601
      %v609 = vadd.s32 %v597, 4294967280
      %v610 = vlaneseq
      %v611 = vshrl.u32 %v610, 7
      %v612 = vsub.s32 %v609, %v611
      %v613 = vrot.slane %v508, %v612
      %vm614 = vcmask 195712
      %v615 = vsel %vm614, %v613, %v608
      %v616 = vadd.s32 %v597, 4294967272
      %v617 = vlaneseq
      %v618 = vshrl.u32 %v617, 7
      %v619 = vsub.s32 %v616, %v618
      %v620 = vrot.slane %v511, %v619
      %vm621 = vcmask 261312
      %v622 = vsel %vm621, %v620, %v615
      %v623 = vlaneseq
      %v624 = vshrl.u32 %v623, 7
      %v625 = vsub.s32 %v597, %v624
      %v626 = vrot.slane %v514, %v625
      %v627 = vlaneseq
      %v628 = vshrl.u32 %v627, 7
      %v629 = vsub.s32 %v602, %v628
      %v630 = vrot.slane %v517, %v629
      %v631 = vsel %vm607, %v630, %v626
      %v632 = vlaneseq
      %v633 = vshrl.u32 %v632, 7
      %v634 = vsub.s32 %v609, %v633
      %v635 = vrot.slane %v520, %v634
      %v636 = vsel %vm614, %v635, %v631
      %v637 = vlaneseq
      %v638 = vshrl.u32 %v637, 7
      %v639 = vsub.s32 %v616, %v638
      %v640 = vrot.slane %v523, %v639
      %v641 = vsel %vm621, %v640, %v636
      %v642 = vlaneseq
      %v643 = vshrl.u32 %v642, 7
      %v644 = vsub.s32 %v597, %v643
      %v645 = vrot.slane %v526, %v644
      %v646 = vlaneseq
      %v647 = vshrl.u32 %v646, 7
      %v648 = vsub.s32 %v602, %v647
      %v649 = vrot.slane %v529, %v648
      %v650 = vsel %vm607, %v649, %v645
      %v651 = vlaneseq
      %v652 = vshrl.u32 %v651, 7
      %v653 = vsub.s32 %v609, %v652
      %v654 = vrot.slane %v532, %v653
      %v655 = vsel %vm614, %v654, %v650
      %v656 = vlaneseq
      %v657 = vshrl.u32 %v656, 7
      %v658 = vsub.s32 %v616, %v657
      %v659 = vrot.slane %v535, %v658
      %v660 = vsel %vm621, %v659, %v655
      %v661 = vlaneseq
      %v662 = vshrl.u32 %v661, 7
      %v663 = vsub.s32 %v597, %v662
      %v664 = vrot.slane %v538, %v663
      %v665 = vlaneseq
      %v666 = vshrl.u32 %v665, 7
      %v667 = vsub.s32 %v602, %v666
      %v668 = vrot.slane %v541, %v667
      %v669 = vsel %vm607, %v668, %v664
      %v670 = vlaneseq
      %v671 = vshrl.u32 %v670, 7
      %v672 = vsub.s32 %v609, %v671
      %v673 = vrot.slane %v544, %v672
      %v674 = vsel %vm614, %v673, %v669
      %v675 = vlaneseq
      %v676 = vshrl.u32 %v675, 7
      %v677 = vsub.s32 %v616, %v676
      %v678 = vrot.slane %v547, %v677
      %v679 = vsel %vm621, %v678, %v674
      %v680 = vlaneseq
      %v681 = vshrl.u32 %v680, 7
      %v682 = vsub.s32 %v597, %v681
      %v683 = vrot.slane %v550, %v682
      %v684 = vlaneseq
      %v685 = vshrl.u32 %v684, 7
      %v686 = vsub.s32 %v602, %v685
      %v687 = vrot.slane %v553, %v686
      %v688 = vsel %vm607, %v687, %v683
      %v689 = vlaneseq
      %v690 = vshrl.u32 %v689, 7
      %v691 = vsub.s32 %v609, %v690
      %v692 = vrot.slane %v556, %v691
      %v693 = vsel %vm614, %v692, %v688
      %v694 = vlaneseq
      %v695 = vshrl.u32 %v694, 7
      %v696 = vsub.s32 %v616, %v695
      %v697 = vrot.slane %v559, %v696
      %v698 = vsel %vm621, %v697, %v693
      %v699 = vlaneseq
      %v700 = vshrl.u32 %v699, 7
      %v701 = vsub.s32 %v597, %v700
      %v702 = vrot.slane %v562, %v701
      %v703 = vlaneseq
      %v704 = vshrl.u32 %v703, 7
      %v705 = vsub.s32 %v602, %v704
      %v706 = vrot.slane %v565, %v705
      %v707 = vsel %vm607, %v706, %v702
      %v708 = vlaneseq
      %v709 = vshrl.u32 %v708, 7
      %v710 = vsub.s32 %v609, %v709
      %v711 = vrot.slane %v568, %v710
      %v712 = vsel %vm614, %v711, %v707
      %v713 = vlaneseq
      %v714 = vshrl.u32 %v713, 7
      %v715 = vsub.s32 %v616, %v714
      %v716 = vrot.slane %v571, %v715
      %v717 = vsel %vm621, %v716, %v712
      %v718 = vlaneseq
      %v719 = vshrl.u32 %v718, 7
      %v720 = vsub.s32 %v597, %v719
      %v721 = vrot.slane %v574, %v720
      %v722 = vlaneseq
      %v723 = vshrl.u32 %v722, 7
      %v724 = vsub.s32 %v602, %v723
      %v725 = vrot.slane %v577, %v724
      %v726 = vsel %vm607, %v725, %v721
      %v727 = vlaneseq
      %v728 = vshrl.u32 %v727, 7
      %v729 = vsub.s32 %v609, %v728
      %v730 = vrot.slane %v580, %v729
      %v731 = vsel %vm614, %v730, %v726
      %v732 = vlaneseq
      %v733 = vshrl.u32 %v732, 7
      %v734 = vsub.s32 %v616, %v733
      %v735 = vrot.slane %v583, %v734
      %v736 = vsel %vm621, %v735, %v731
      %v737 = vlaneseq
      %v738 = vshrl.u32 %v737, 7
      %v739 = vsub.s32 %v597, %v738
      %v740 = vrot.slane %v586, %v739
      %v741 = vlaneseq
      %v742 = vshrl.u32 %v741, 7
      %v743 = vsub.s32 %v602, %v742
      %v744 = vrot.slane %v589, %v743
      %v745 = vsel %vm607, %v744, %v740
      %v746 = vlaneseq
      %v747 = vshrl.u32 %v746, 7
      %v748 = vsub.s32 %v609, %v747
      %v749 = vrot.slane %v592, %v748
      %v750 = vsel %vm614, %v749, %v745
      %v751 = vlaneseq
      %v752 = vshrl.u32 %v751, 7
      %v753 = vsub.s32 %v616, %v752
      %v754 = vrot.slane %v595, %v753
      %v755 = vsel %vm621, %v754, %v750
      %vm756 = vcmask 1041409
      %v757 = vsel %vm756, %v641, %v622
      %vm758 = vcmask 1042434
      %v759 = vsel %vm758, %v660, %v757
      %vm760 = vcmask 1043459
      %v761 = vsel %vm760, %v679, %v759
      %vm762 = vcmask 1044484
      %v763 = vsel %vm762, %v698, %v761
      %vm764 = vcmask 1045509
      %v765 = vsel %vm764, %v717, %v763
      %vm766 = vcmask 1046534
      %v767 = vsel %vm766, %v736, %v765
      %vm768 = vcmask 1047559
      %v769 = vsel %vm768, %v755, %v767
      %vm771 = vcmask 261120
      %v772 = vsel %vm771, %v769, 0.0
      %773 = vadd.xlane.f32.xlu0 %v772
      %v774 = vpop.xlane.xlu0 %773
      %v775 = vld [vmem:[%s2] sm:$0x1]
      %v777 = vlaneseq
      %v778 = vshrl.u32 %v777, 7
      %v779 = vsub.s32 0, %v778
      %v780 = vrot.slane %v775, %v779
      %782 = vbcast.lane.b32.xlu0 %v780, 256
      %v783 = vpop.permute.xlu0 %782
      %v785 = vadd.f32 %v774, %v783
      %v786 = vmax.f32 %v785, 0.0
      %v787 = vld [vmem:[%s3] sm:$0xff]
      %789 = vset.pattern.permute.xlu0 0
      %790 = vperm.xlu0 %789, %v786
      %v791 = vpop.permute.xlu0 %790
      %v793 = vmul.f32 %v791, %v787
      %v794 = vsel %vm771, %v793, 0.0
      %v795 = vrot.slane %v794, 4
      %v796 = vadd.f32 %v794, %v795
      %v797 = vrot.slane %v796, 2
      %v798 = vadd.f32 %v796, %v797
      %v799 = vrot.slane %v798, 1
      %v800 = vadd.f32 %v798, %v799
      %v801 = vld [vmem:[%s4] sm:$0x1]
      %v802 = vadd.f32 %v800, %v801
      %v803 = vxor.u32 %v802, 2147483648
      %v804 = vmul.f32 %v803, 1.442695
      %v805 = vpow.pop %v804
      %v806 = vadd.f32 %v805, 1.0
      %v807 = vrcp.pop %v806
      %v808 = vmul.f32 1.0, %v807
      %v809 = vlaneseq
      %v810 = vshrl.u32 %v809, 7
      %v811 = vsub.s32 0, %v810
      %v812 = vrot.slane %v808, %v811
      %814 = vbcast.lane.b32.xlu0 %v812, 256
      %v815 = vpop.permute.xlu0 %814
      %s817 = sor.u32 256, 8
      %818 = vbcast.lane.b32.xlu0 %v812, %s817
      %v819 = vpop.permute.xlu0 %818
      %s821 = sor.u32 256, 16
      %822 = vbcast.lane.b32.xlu0 %v812, %s821
      %v823 = vpop.permute.xlu0 %822
      %s825 = sor.u32 256, 24
      %826 = vbcast.lane.b32.xlu0 %v812, %s825
      %v827 = vpop.permute.xlu0 %826
      %v828 = vmul.f32 %v225, %v815
      %v829 = vmul.f32 %v226, %v815
      %v830 = vmul.f32 %v227, %v819
      %v831 = vmul.f32 %v228, %v819
      %v832 = vmul.f32 %v229, %v823
      %v833 = vmul.f32 %v230, %v823
      %v834 = vmul.f32 %v231, %v827
      %v835 = vmul.f32 %v232, %v827
      %836 = vst [vmem:[%s224] sm:$0xff] %v828
      %837 = vst [vmem:[%s224 + $0x8] sm:$0xff] %v829
      %838 = vst [vmem:[%s224 + $0x10] sm:$0xff] %v830
      %839 = vst [vmem:[%s224 + $0x18] sm:$0xff] %v831
      %840 = vst [vmem:[%s224 + $0x20] sm:$0xff] %v832
      %841 = vst [vmem:[%s224 + $0x28] sm:$0xff] %v833
      %842 = vst [vmem:[%s224 + $0x30] sm:$0xff] %v834
      %843 = vst [vmem:[%s224 + $0x38] sm:$0xff] %v835
      %p844 = scmp.lt.s32.totalorder %s16, 1
      %s845 = scalar_select %p844, %s16, 1
      %s846 = smul.addr %s845, 8
      %s847 = smul.addr %s846, 8
      %s848 = scalar_lea.vmem %s5, %s847
      // Predicated region
      $region41: #{se_block.1} parent=39 // pred_check
        %p849 = pneg %p144
      $region42: #{se_block.1} parent=39 // pred_check_branch
        %851 = sbr.rel (%p849) target = $region44
      $region43: #{se_block.1} parent=39 // pred_region
        _
      $region44: #{se_block.1} parent=39 // pred_fallthru
        _
    $region40: #{se_block.1} parent=5 // pred_fallthru
      _
    %p852 = scmp.le.s32.totalorder 2, %s11
    // Predicated region
    $region45: #{se_block.1} parent=5 // pred_check
      %p853 = pneg %p852
    $region46: #{se_block.1} parent=5 // pred_check_branch
      %855 = sbr.rel (%p853) target = $region48
    $region47: #{se_block.1} parent=5 // pred_region
      %s856 = ssub.s32 %s11, 2
      // Predicated region
      $region49: #{se_block.1} parent=47 // pred_check
        %p857 = pneg %p150
      $region50: #{se_block.1} parent=47 // pred_check_branch
        %859 = sbr.rel (%p857) target = $region52
      $region51: #{se_block.1} parent=47 // pred_region
        %p860 = scmp.lt.s32.totalorder %s17, 1
        %s861 = scalar_select %p860, %s17, 1
        %s862 = smul.addr %s861, 8
        %s863 = smul.addr %s862, 8
        %s864 = scalar_lea.vmem %s5, %s863
      $region52: #{se_block.1} parent=47 // pred_fallthru
        _
    $region48: #{se_block.1} parent=5 // pred_fallthru
      _
  $region6: #{se_block.1} parent=0 // loop_footer
    %s15 = sadd.s32 1, %s11
  $region7: #{se_block.1} parent=0 // loop_footer_branch
    %10 = sbr.rel target = $region3
  $region8: #{se_block.1} parent=0 // loop_exit
    _

</llo_original>
